<compile_context>
chip_gen: v6e
topology: v6e:2x2x1
jax: 0.10.0
libtpu: 0.0.40
codegen_flags: <defaults>
</compile_context>

<pallas_src>
import functools

import jax
import jax.numpy as jnp
from jax import lax
from jax.experimental import pallas as pl
from jax.experimental.pallas import tpu as pltpu

ALPHA = 0.8
GAMMA = 2

_LANE_CANDIDATES = (1024, 512, 256, 128)   # lane-dense last dim (mult of 128)
_TARGET_TILE_BYTES = 8 << 20               # combined x+t bytes per grid step
_CHUNK_ELEMS = 1 << 17                     # inner-loop chunk (bounds VMEM temps)
_VMEM_LIMIT_BYTES = 40 << 20               # fits v5e/v6e (128 MiB) and v7x (64 MiB)


def _bce_partial_kernel(x_ref, t_ref, part_ref, *, tile_rows, lanes, chunk,
                        valid_rows_last, needs_mask):
    """Per-tile BCE-with-logits partial sums, reduced to an (8, lanes) slab."""
    num_chunks = tile_rows // chunk

    def chunk_body(c, acc, row_limit):
        r0 = c * chunk
        if not isinstance(r0, int):
            r0 = pl.multiple_of(r0, chunk)
        xs = x_ref[pl.ds(r0, chunk), :].astype(jnp.float32)
        ts = t_ref[pl.ds(r0, chunk), :].astype(jnp.float32)
        # Numerically-stable binary_cross_entropy_with_logits (elementwise).
        bce = (jnp.maximum(xs, 0.0) - xs * ts
               + jnp.log1p(jnp.exp(-jnp.abs(xs))))
        if row_limit is not None:
            # Only reached on the last (partial) tile: zero out garbage rows
            # coming from the out-of-bounds part of the trailing block.
            row = r0 + lax.broadcasted_iota(jnp.int32, (chunk, lanes), 0)
            bce = jnp.where(row < row_limit, bce, 0.0)
        # Pure-VPU reduce of the chunk to an (8, lanes) partial.
        return acc + jnp.sum(bce.reshape(chunk // 8, 8, lanes), axis=0)

    def tile_sum(row_limit):
        zero = jnp.zeros((8, lanes), jnp.float32)
        if num_chunks == 1:
            return chunk_body(0, zero, row_limit)
        return lax.fori_loop(0, num_chunks,
                             lambda c, a: chunk_body(c, a, row_limit),
                             zero, unroll=(num_chunks <= 8))

    if needs_mask:
        is_last = pl.program_id(0) == pl.num_programs(0) - 1

        @pl.when(is_last)
        def _():
            part_ref[...] = tile_sum(valid_rows_last)

        @pl.when(jnp.logical_not(is_last))
        def _():
            part_ref[...] = tile_sum(None)
    else:
        part_ref[...] = tile_sum(None)


def focal_loss(inputs, targets):
    """inputs: (B, C, H, W) logits; targets: probabilities with the same
    element count (typically (B*C*H, W), matching the PyTorch call)."""
    assert inputs.size == targets.size, "targets must match inputs elementwise"

    x = inputs.reshape(-1)          # row-major == torch .flatten(0, 2) order
    t = targets.reshape(-1)
    total_n = x.size

    pad = (-total_n) % (8 * 128)
    if pad:
        # Rare fallback (element count not a multiple of 1024).  Pad values
        # (x=1e4, t=1) give BCE exactly 0 for pad elements, so no masking is
        # needed for them; the mean still divides by the true total_n.
        # TODO(synk): this path materializes a padded copy in HBM; the common
        # lane-aligned case below is fully zero-copy.
        x = jnp.pad(x, (0, pad), constant_values=1e4)
        t = jnp.pad(t, (0, pad), constant_values=1.0)
    padded_n = total_n + pad

    lanes = 128
    for cand in _LANE_CANDIDATES:
        if padded_n % (8 * cand) == 0:
            lanes = cand
            break
    rows = padded_n // lanes                      # multiple of 8

    # Free bitcast reshapes (no HBM copy): contiguous row-major arrays.
    x2d = x.reshape(rows, lanes)
    t2d = t.reshape(rows, lanes)

    # Tile sizing: ~_TARGET_TILE_BYTES of combined x+t per grid step.
    itemsize = x2d.dtype.itemsize + t2d.dtype.itemsize
    max_tile_rows = max(8, ((_TARGET_TILE_BYTES // itemsize) // lanes) // 8 * 8)
    tile_rows = min(max_tile_rows, rows)
    num_tiles = -(-rows // tile_rows)
    valid_rows_last = rows - (num_tiles - 1) * tile_rows
    needs_mask = valid_rows_last != tile_rows     # partial trailing block only

    chunk = min(tile_rows, max(8, (_CHUNK_ELEMS // lanes) // 8 * 8))
    while chunk > 8 and tile_rows % chunk:
        chunk //= 2                               # tile_rows is a multiple of 8

    kernel = functools.partial(
        _bce_partial_kernel,
        tile_rows=tile_rows, lanes=lanes, chunk=chunk,
        valid_rows_last=valid_rows_last, needs_mask=needs_mask)

    bytes_accessed = (x2d.size * x2d.dtype.itemsize
                      + t2d.size * t2d.dtype.itemsize
                      + num_tiles * 8 * lanes * 4)

    partials = pl.pallas_call(
        kernel,
        out_shape=jax.ShapeDtypeStruct((num_tiles * 8, lanes), jnp.float32),
        grid_spec=pltpu.PrefetchScalarGridSpec(
            num_scalar_prefetch=0,
            grid=(num_tiles,),
            in_specs=[
                pl.BlockSpec((tile_rows, lanes), lambda i: (i, 0)),
                pl.BlockSpec((tile_rows, lanes), lambda i: (i, 0)),
            ],
            out_specs=pl.BlockSpec((8, lanes), lambda i: (i, 0)),
        ),
        compiler_params=pltpu.CompilerParams(
            dimension_semantics=("parallel",),    # independent per-tile partials
            vmem_limit_bytes=_VMEM_LIMIT_BYTES,
        ),
        cost_estimate=pl.CostEstimate(
            flops=6 * total_n,
            transcendentals=2 * total_n,
            bytes_accessed=int(bytes_accessed),
        ),
    )(x2d, t2d)

    # Final (tiny) reduce + focal transform in plain JAX.
    mean_bce = jnp.sum(partials, dtype=jnp.float32) / jnp.float32(total_n)
    bce_exp = jnp.exp(-mean_bce)
    return ALPHA * (1.0 - bce_exp) ** GAMMA * mean_bce


def focal_loss_ref(inputs, targets):
    """Pure-JAX reference (mirrors the PyTorch module)."""
    x = inputs.reshape(-1).astype(jnp.float32)
    t = targets.reshape(-1).astype(jnp.float32)
    bce = jnp.mean(jnp.maximum(x, 0.0) - x * t + jnp.log1p(jnp.exp(-jnp.abs(x))))
    bce_exp = jnp.exp(-bce)
    return ALPHA * (1.0 - bce_exp) ** GAMMA * bce


if __name__ == "__main__":
    key = jax.random.PRNGKey(0)
    k1, k2 = jax.random.split(key)

    B, C, H, W = 2, 4, 16, 16
    inputs = jax.random.normal(k1, (B, C, H, W), dtype=jnp.float32)      # logits
    targets = jax.random.uniform(k2, (B * C * H, W), dtype=jnp.float32)  # probs

    loss = focal_loss(inputs, targets)
    jax.block_until_ready(loss)

    ref = focal_loss_ref(inputs, targets)
    assert jnp.allclose(loss, ref, rtol=1e-5, atol=1e-6), (loss, ref)

    print("KERNEL_OK")
</pallas_src>

<mosaic_0001>
module attributes {stable_mosaic.version = 11 : i64} {
  func.func @_bce_partial_kernel(%arg0: i32, %arg1: memref<8x256xf32, #tpu.memory_space<vmem>>, %arg2: memref<8x256xf32, #tpu.memory_space<vmem>>, %arg3: memref<8x256xf32, #tpu.memory_space<vmem>>) attributes {dimension_semantics = [#tpu.dimension_semantics<parallel>], iteration_bounds = array<i64: 1>, scalar_prefetch = 0 : i64, scratch_operands = 0 : i64, tpu.core_type = #tpu.core_type<tc>, window_params = [{transform_indices = @transform_0, window_bounds = array<i64: 8, 256>}, {transform_indices = @transform_1, window_bounds = array<i64: 8, 256>}, {transform_indices = @transform_2, window_bounds = array<i64: 8, 256>}]} {
    %cst = arith.constant 0.000000e+00 : f32
    %0 = vector.broadcast %cst : f32 to vector<8x256xf32>
    %c0 = arith.constant 0 : index
    %c0_0 = arith.constant 0 : index
    %1 = vector.load %arg1[%c0, %c0_0] : memref<8x256xf32, #tpu.memory_space<vmem>>, vector<8x256xf32>
    %c0_1 = arith.constant 0 : index
    %c0_2 = arith.constant 0 : index
    %2 = vector.load %arg2[%c0_1, %c0_2] : memref<8x256xf32, #tpu.memory_space<vmem>>, vector<8x256xf32>
    %cst_3 = arith.constant 0.000000e+00 : f32
    %3 = vector.broadcast %cst_3 : f32 to vector<8x256xf32>
    %4 = arith.maximumf %1, %3 : vector<8x256xf32>
    %5 = arith.mulf %1, %2 : vector<8x256xf32>
    %6 = arith.subf %4, %5 : vector<8x256xf32>
    %7 = math.absf %1 : vector<8x256xf32>
    %cst_4 = arith.constant 0.000000e+00 : f32
    %8 = vector.broadcast %cst_4 : f32 to vector<8x256xf32>
    %9 = arith.subf %8, %7 : vector<8x256xf32>
    %10 = math.exp %9 : vector<8x256xf32>
    %11 = math.log1p %10 : vector<8x256xf32>
    %12 = arith.addf %6, %11 : vector<8x256xf32>
    %13 = vector.shape_cast %12 : vector<8x256xf32> to vector<1x8x256xf32>
    %cst_5 = arith.constant dense<0.000000e+00> : vector<8x256xf32>
    %14 = vector.multi_reduction <add>, %13, %cst_5 [0] : vector<1x8x256xf32> to vector<8x256xf32>
    %15 = arith.addf %0, %14 : vector<8x256xf32>
    %c0_6 = arith.constant 0 : index
    %c0_7 = arith.constant 0 : index
    %16 = vector.load %arg3[%c0_6, %c0_7] : memref<8x256xf32, #tpu.memory_space<vmem>>, vector<8x256xf32>
    tpu.vector_store %arg3[%c0_6, %c0_7], %15 {strides = array<i32>} : memref<8x256xf32, #tpu.memory_space<vmem>>, vector<8x256xf32>,
    return
  }
  func.func @transform_0(%arg0: i32) -> (i32, i32) {
    %c0_i32 = arith.constant 0 : i32
    %c0_i32_0 = arith.constant 0 : i32
    return %arg0, %c0_i32 : i32, i32
  }
  func.func @transform_1(%arg0: i32) -> (i32, i32) {
    %c0_i32 = arith.constant 0 : i32
    %c0_i32_0 = arith.constant 0 : i32
    return %arg0, %c0_i32 : i32, i32
  }
  func.func @transform_2(%arg0: i32) -> (i32, i32) {
    %c0_i32 = arith.constant 0 : i32
    %c0_i32_0 = arith.constant 0 : i32
    return %arg0, %c0_i32 : i32, i32
  }
}

</mosaic_0001>

<llo_original>
// kernel: tpu_custom_call.1
$region0: #{tpu_custom_call.1}
  #allocation0 [shape = 'u32[]', space=smem, size = 0x4, offset = 0x4, fixed_abs, tag = 'smem constant byte address 0x4 - core index']
  #allocation1 [shape = 'u32[144,128]{1,0:T(1,128)}', space=vmem, size = 0x12000, scoped, tag = 'internal scratch']
  %s0 = inlined_call_operand.hbm [shape: f32[8,256], index: 0, kind: input, shape index: {}]
  %s1 = inlined_call_operand.hbm [shape: f32[8,256], index: 1, kind: input, shape index: {}]
  %s2 = inlined_call_operand.hbm [shape: f32[8,256], index: 2, kind: output, shape index: {}]
  %s3 = sld [smem:[#allocation0]]
  $region26: #{tpu_custom_call.1} parent=0
    _
  %s5 = ssub.s32 1, %s3
  %s6 = scalar_select 0, %s5, %s3
  $region1: #{tpu_custom_call.1} parent=0
    #allocation2 [shape = 'u8[8192]{0}', space=vmem, size = 0x2000, scoped, tag = 'input window, operand 0, single buffered']
    #allocation3 [shape = 's32[1]{0}', space=sflag, size = 0x4, scoped, tag = 'scoped memory for tpu_custom_call.1']
    #allocation4 [shape = 's32[1]{0}', space=sflag, size = 0x4, scoped, tag = 'scoped memory for tpu_custom_call.1']
    #allocation5 [shape = 'u8[8192]{0}', space=vmem, size = 0x2000, scoped, tag = 'input window, operand 1, single buffered']
    #allocation6 [shape = 's32[1]{0}', space=sflag, size = 0x4, scoped, tag = 'scoped memory for tpu_custom_call.1']
    #allocation7 [shape = 'u8[8192]{0}', space=vmem, size = 0x2000, scoped, tag = 'output window, operand 0, single buffered']
    %7 = vsyncpa [#allocation3], 0
    %8 = vsyncpa [#allocation6], 0
    %9 = vsyncpa [#allocation4], 0
    // Predicated region
    $region2: #{tpu_custom_call.1} parent=1 // pred_check
      _
    $region3: #{tpu_custom_call.1} parent=1 // pred_check_branch
      %11 = sbr.rel (0) target = $region5
    $region4: #{tpu_custom_call.1} parent=1 // pred_region
      %s13 = ssub.s32 256, 256
      %14 = vsyncadd [#allocation3], %s13
      %s16 = sshll.u32 [#allocation2], 4
      %s17 = int_to_ptr.vmem [resolvable:$true] %s16
      %19 = dma.hbm_to_vmem [thread:$0]  %s0, 256, %s17, [#allocation3]
    $region5: #{tpu_custom_call.1} parent=1 // pred_fallthru
      _
    // Predicated region
    $region6: #{tpu_custom_call.1} parent=1 // pred_check
      _
    $region7: #{tpu_custom_call.1} parent=1 // pred_check_branch
      %21 = sbr.rel (0) target = $region9
    $region8: #{tpu_custom_call.1} parent=1 // pred_region
      %s23 = ssub.s32 256, 256
      %24 = vsyncadd [#allocation6], %s23
      %s26 = sshll.u32 [#allocation5], 4
      %s27 = int_to_ptr.vmem [resolvable:$true] %s26
      %29 = dma.hbm_to_vmem [thread:$0]  %s1, 256, %s27, [#allocation6]
    $region9: #{tpu_custom_call.1} parent=1 // pred_fallthru
      _
    // Predicated region
    $region10: #{tpu_custom_call.1} parent=1 // pred_check
      _
    $region11: #{tpu_custom_call.1} parent=1 // pred_check_branch
      %31 = sbr.rel (0) target = $region13
    $region12: #{tpu_custom_call.1} parent=1 // pred_region
      %32 = dma.done [#allocation3], 256
    $region13: #{tpu_custom_call.1} parent=1 // pred_fallthru
      _
    // Predicated region
    $region14: #{tpu_custom_call.1} parent=1 // pred_check
      _
    $region15: #{tpu_custom_call.1} parent=1 // pred_check_branch
      %34 = sbr.rel (0) target = $region17
    $region16: #{tpu_custom_call.1} parent=1 // pred_region
      %35 = dma.done [#allocation6], 256
    $region17: #{tpu_custom_call.1} parent=1 // pred_fallthru
      _
    %v36 = vld [vmem:[#allocation2] sm:$0xff]
    %v37 = vld [vmem:[#allocation2 + $0x8] sm:$0xff]
    %v38 = vld [vmem:[#allocation5] sm:$0xff]
    %v39 = vld [vmem:[#allocation5 + $0x8] sm:$0xff]
    %v40 = vmax.f32 %v36, 0.0
    %v41 = vmax.f32 %v37, 0.0
    %v42 = vmul.f32 %v36, %v38
    %v43 = vmul.f32 %v37, %v39
    %v44 = vsub.f32 %v40, %v42
    %v45 = vsub.f32 %v41, %v43
    %v46 = vand.u32 2147483647, %v36
    %v47 = vand.u32 2147483647, %v37
    %v48 = vsub.f32 0.0, %v46
    %v49 = vsub.f32 0.0, %v47
    %v50 = vmul.f32 %v48, 1.442695
    %v51 = vpow.pop %v50
    %v52 = vmul.f32 %v49, 1.442695
    %v53 = vpow.pop %v52
    %v54 = vadd.f32 %v51, 1.0
    %v55 = vlog2.pop %v54
    %v56 = vmul.f32 %v55, 0.6931472
    %v57 = vmul.f32 -0.5, %v51
    %v58 = vadd.f32 %v57, 1.0
    %v59 = vmul.f32 %v58, %v51
    %v60 = vand.u32 2147483647, %v51
    %vm61 = vcmp.lt.f32.partialorder %v60, 0.0004427343
    %v62 = vsel %vm61, %v59, %v56
    %v63 = vadd.f32 %v53, 1.0
    %v64 = vlog2.pop %v63
    %v65 = vmul.f32 %v64, 0.6931472
    %v66 = vmul.f32 -0.5, %v53
    %v67 = vadd.f32 %v66, 1.0
    %v68 = vmul.f32 %v67, %v53
    %v69 = vand.u32 2147483647, %v53
    %vm70 = vcmp.lt.f32.partialorder %v69, 0.0004427343
    %v71 = vsel %vm70, %v68, %v65
    %v72 = vadd.f32 %v44, %v62
    %v73 = vadd.f32 %v45, %v71
    %v74 = vadd.f32 %v72, 0.0
    %v75 = vadd.f32 %v73, 0.0
    %v76 = vadd.f32 %v74, 0.0
    %v77 = vadd.f32 %v75, 0.0
    %78 = vst [vmem:[#allocation7] sm:$0xff] %v76
    %79 = vst [vmem:[#allocation7 + $0x8] sm:$0xff] %v77
    // Predicated region
    $region18: #{tpu_custom_call.1} parent=1 // pred_check
      _
    $region19: #{tpu_custom_call.1} parent=1 // pred_check_branch
      %81 = sbr.rel (0) target = $region21
    $region20: #{tpu_custom_call.1} parent=1 // pred_region
      %s83 = ssub.s32 256, 256
      %84 = vsyncadd [#allocation4], %s83
      %s86 = sshll.u32 [#allocation7], 4
      %s87 = int_to_ptr.vmem [resolvable:$true] %s86
      %89 = dma.vmem_to_hbm [thread:$0]  %s87, 256, %s2, [#allocation4]
    $region21: #{tpu_custom_call.1} parent=1 // pred_fallthru
      _
    // Predicated region
    $region22: #{tpu_custom_call.1} parent=1 // pred_check
      _
    $region23: #{tpu_custom_call.1} parent=1 // pred_check_branch
      %91 = sbr.rel (0) target = $region25
    $region24: #{tpu_custom_call.1} parent=1 // pred_region
      %92 = dma.done [#allocation4], 256
    $region25: #{tpu_custom_call.1} parent=1 // pred_fallthru
      _
    %93 = vsyncpa [#allocation3], 1
    %94 = vsyncpa [#allocation6], 1
    %95 = vsyncpa [#allocation4], 1

</llo_original>
